<compile_context>
chip_gen: v5e
topology: v5e:2x2
jax: 0.10.0
libtpu: 0.0.40
codegen_flags: <defaults>
</compile_context>

<pallas_src>
import functools

import jax
import jax.numpy as jnp
from jax import lax
from jax.experimental import pallas as pl
from jax.experimental.pallas import tpu as pltpu


def _round_up(x, m):
    return ((x + m - 1) // m) * m


# Contract dim 1 of both operands: x @ W.T with W in PyTorch (out, in) layout.
_DOT_T = (((1,), (1,)), ((), ()))


def _physical_vmem_bytes():
    # Narrow hardware query with a conservative default (64 MiB = v7x per-TC
    # VMEM).  Never wraps kernel construction, so real lowering errors surface.
    try:
        return int(pltpu.get_tpu_info().vmem_capacity_bytes)
    except Exception:
        return 64 * 1024 * 1024


@functools.lru_cache(maxsize=None)
def _single_buffer_supported():
    """Capability probe: does this Pallas build accept pipeline_mode=Buffered(1)?

    Probing a tiny standalone kernel keeps the *real* kernel un-wrapped, so its
    lowering/trace errors surface normally (no bare-except fallback that would
    silently double-buffer all weights).
    """
    if not hasattr(pl, "Buffered"):
        return False
    try:
        spec = pl.BlockSpec((8, 128), lambda i: (0, 0),
                            pipeline_mode=pl.Buffered(1))
    except TypeError:
        return False

    def _probe(x_ref, o_ref):
        o_ref[...] = x_ref[...] + 1.0

    try:
        x = jnp.zeros((8, 128), jnp.float32)
        out = pl.pallas_call(
            _probe, grid=(1,), in_specs=[spec],
            out_specs=pl.BlockSpec((8, 128), lambda i: (0, 0)),
            out_shape=jax.ShapeDtypeStruct((8, 128), jnp.float32))(x)
        jax.block_until_ready(out)
        return True
    except Exception:
        return False


def _embedding_kernel(ids_ref, table_ref, wp_ref, wtg_ref, btg_ref, o_ref,
                      gather_buf, gather_sem, *, num_layers, tile_m, n_inner,
                      hidden_pad, table_in_vmem, approx_sigmoid, dma_unroll):
    o = pl.program_id(0)            # "parallel" outer axis (v7x TC sharding)
    j = pl.program_id(1)            # "arbitrary" inner axis (sequential)
    t = o * n_inner + j             # global row-tile index

    if table_in_vmem:
        # --- Small-vocab fast path: table resident in VMEM ------------------
        # Gather rows with dynamic sublane slices -> no DMA descriptors at all.
        base = t * tile_m

        def gather_row(r, carry):
            token = ids_ref[base + r]
            gather_buf[0, pl.ds(r, 1), :] = table_ref[pl.ds(token, 1), :]
            return carry

        lax.fori_loop(0, tile_m, gather_row, 0, unroll=dma_unroll)
        rows = gather_buf[0]
    else:
        # --- HBM gather, double-buffered across inner grid steps ------------
        def issue_tile(tile_idx, slot):
            base = tile_idx * tile_m

            def start_row(r, carry):
                token = ids_ref[base + r]
                pltpu.make_async_copy(
                    table_ref.at[pl.ds(token, 1), :],
                    gather_buf.at[slot, pl.ds(r, 1), :],
                    gather_sem.at[slot]).start()
                return carry

            lax.fori_loop(0, tile_m, start_row, 0, unroll=dma_unroll)

        slot = j & 1

        @pl.when(j == 0)
        def _():                       # prime this core's first inner tile
            issue_tile(t, 0)

        # Single byte-counted wait for the whole tile: all tile_m row copies
        # signal gather_sem[slot]; this fixed-source descriptor has the same
        # total byte count, so no per-row descriptor rebuilds / SMEM re-reads.
        pltpu.make_async_copy(table_ref.at[pl.ds(0, tile_m), :],
                              gather_buf.at[slot],
                              gather_sem.at[slot]).wait()

        @pl.when(j + 1 < n_inner)
        def _():                       # prefetch next tile behind this compute
            issue_tile(t + 1, 1 - slot)

        rows = gather_buf[slot]

    # Projection (no bias): native-dtype operands on the MXU, f32 accumulation.
    x = lax.dot_general(rows.astype(wp_ref.dtype), wp_ref[...], _DOT_T,
                        preferred_element_type=jnp.float32)

    w_dt = wtg_ref.dtype
    for l in range(num_layers):        # static & small -> unrolled at trace
        # Fused transform+gate matmul: N = 2*H_pad (>=256 wide, MXU-native).
        z = lax.dot_general(x.astype(w_dt), wtg_ref[l], _DOT_T,
                            preferred_element_type=jnp.float32)
        z = z + btg_ref[l].astype(jnp.float32)
        tr = jnp.maximum(z[:, :hidden_pad], 0.0)          # transform, ReLU
        zg = z[:, hidden_pad:]                            # gate pre-activation
        if approx_sigmoid:
            g = pl.reciprocal(1.0 + jnp.exp(-zg), approx=True)   # EUP exp+rcp
        else:
            g = 1.0 / (1.0 + jnp.exp(-zg))
        # Highway mix g*t + (1-g)*x, activations kept in f32 across layers.
        x = x + g * (tr - x)

    o_ref[...] = x.astype(o_ref.dtype)


def embedding_forward(ids, emb_table, wp, wt, bt, wg, bg, *, tm=None,
                      force_hbm_gather=False, approx_sigmoid=True):
    """Fused BiDAF Embedding forward.

    Args:
      ids:       (batch, seq) int32 token indices.
      emb_table: (vocab, emb_dim) pre-trained word vectors.
      wp:        (hidden, emb_dim) projection weight (PyTorch layout, no bias).
      wt, wg:    (L, hidden, hidden) transform / gate weights (PyTorch layout).
      bt, bg:    (L, hidden) transform / gate biases.
    Returns:
      (batch, seq, hidden) activations with dtype of wp.
    """
    B, S = ids.shape
    V, E = emb_table.shape
    H = wp.shape[0]
    L = wt.shape[0]
    M = B * S

    # Lane-dense padding (last dims -> multiples of 128).
    E_pad = _round_up(E, 128)
    H_pad = _round_up(H, 128)

    w_dt = wp.dtype
    w_item = jnp.dtype(w_dt).itemsize
    e_item = jnp.dtype(emb_table.dtype).itemsize

    phys_vmem = _physical_vmem_bytes()
    vmem_cap = int(phys_vmem * 0.8)       # ~51 MiB on v7x, ~102 MiB on v5e/v6e
    headroom = 4 << 20                    # Mosaic internal scratch headroom

    single_buf = _single_buffer_supported()
    wbuf = 1 if single_buf else 2         # constant weight blocks: 1 or 2 bufs
    weight_bytes = (H_pad * E_pad + 2 * L * H_pad * H_pad
                    + 2 * L * H_pad) * w_item

    V8 = _round_up(V, 8)
    table_vmem_bytes = V8 * E_pad * e_item
    table_in_vmem = (not force_hbm_gather) and (
        table_vmem_bytes * wbuf <= min(phys_vmem // 4, 32 << 20))
    n_slots = 1 if table_in_vmem else 2   # gather buffer slots

    fixed_bytes = (weight_bytes * wbuf
                   + (table_vmem_bytes * wbuf if table_in_vmem else 0)
                   + headroom)
    per_row_bytes = 2 * H_pad * w_item + n_slots * E_pad * e_item

    if tm is None:
        budget_rows = max(8, (vmem_cap - fixed_bytes) // per_row_bytes)
        half_m = _round_up(max(1, (M + 1) // 2), 8)   # >=2 tiles for v7x 2 TCs
        tm = int(min(1024, budget_rows, half_m))
        tm = max(8, (tm // 8) * 8)
        if tm >= 256:
            tm = (tm // 128) * 128                    # MXU-row aligned
    tm = _round_up(int(tm), 8)

    M_pad = _round_up(M, tm)
    n_tiles = M_pad // tm
    if n_tiles > 1 and n_tiles % 2 == 1:              # even tile count
        n_tiles += 1
        M_pad = n_tiles * tm
    n_outer = 2 if (n_tiles >= 2 and n_tiles % 2 == 0) else 1
    n_inner = n_tiles // n_outer

    # Pad rows so the fixed-source wait descriptor (tile_m rows) is in-bounds.
    V_rows = V8 if table_in_vmem else _round_up(max(V, tm), 8)

    # TODO(synk): ids scalar-prefetch pins 4*M_pad bytes of SMEM; for very long
    # batch*seq switch ids to per-tile SMEM blocks + a shifted prefetch scheme.
    ids_flat = jnp.pad(ids.reshape(M).astype(jnp.int32), (0, M_pad - M))

    # TODO(synk): in production pad/concat the parameters & table once at init
    # instead of per call (the table pad below copies the whole table).
    table_p = emb_table
    if V_rows != V or E_pad != E:
        table_p = jnp.pad(emb_table, ((0, V_rows - V), (0, E_pad - E)))
    wp_p = wp
    if H_pad != H or E_pad != E:
        wp_p = jnp.pad(wp, ((0, H_pad - H), (0, E_pad - E)))
    pad_h = ((0, 0), (0, H_pad - H), (0, H_pad - H))
    wt_p = jnp.pad(wt, pad_h) if H_pad != H else wt
    wg_p = jnp.pad(wg, pad_h) if H_pad != H else wg
    # N=2*H_pad highway matmul: concat transform/gate along the output dim.
    wtg = jnp.concatenate([wt_p, wg_p], axis=1)            # (L, 2H_pad, H_pad)
    bt_p = jnp.pad(bt, ((0, 0), (0, H_pad - H))) if H_pad != H else bt
    bg_p = jnp.pad(bg, ((0, 0), (0, H_pad - H))) if H_pad != H else bg
    btg = jnp.concatenate([bt_p, bg_p], axis=-1).reshape(L, 1, 2 * H_pad)

    need = (fixed_bytes
            + 2 * tm * H_pad * w_item                 # double-buffered out tile
            + n_slots * tm * E_pad * e_item)          # gather scratch
    vmem_limit = int(min(max(need, 16 << 20), vmem_cap))

    flops = 2 * M_pad * E_pad * H_pad + 2 * L * M_pad * (2 * H_pad) * H_pad
    cost = pl.CostEstimate(
        flops=int(flops),
        transcendentals=int(L * M_pad * H_pad),
        bytes_accessed=int(4 * M_pad + M_pad * E_pad * e_item + weight_bytes
                           + table_vmem_bytes + M_pad * H_pad * w_item))

    def const_spec(shape):
        zeros = (0,) * len(shape)
        kwargs = {}
        if single_buf:
            # Constant block index -> never re-fetched; one VMEM buffer.
            kwargs["pipeline_mode"] = pl.Buffered(1)
        return pl.BlockSpec(shape, lambda o, j, ids: zeros, **kwargs)

    if table_in_vmem:
        table_spec = const_spec((V_rows, E_pad))
    else:
        table_spec = pl.BlockSpec(memory_space=pl.ANY)   # table stays in HBM

    grid_spec = pltpu.PrefetchScalarGridSpec(
        num_scalar_prefetch=1,                # ids -> SMEM (next-tile prefetch)
        grid=(n_outer, n_inner),
        in_specs=[table_spec,
                  const_spec((H_pad, E_pad)),           # projection weight
                  const_spec((L, 2 * H_pad, H_pad)),    # transform|gate weights
                  const_spec((L, 1, 2 * H_pad))],       # transform|gate biases
        out_specs=pl.BlockSpec((tm, H_pad),
                               lambda o, j, ids: (o * n_inner + j, 0)),
        scratch_shapes=[pltpu.VMEM((n_slots, tm, E_pad), emb_table.dtype),
                        pltpu.SemaphoreType.DMA((2,))],
    )

    kernel = functools.partial(
        _embedding_kernel, num_layers=L, tile_m=tm, n_inner=n_inner,
        hidden_pad=H_pad, table_in_vmem=table_in_vmem,
        approx_sigmoid=approx_sigmoid, dma_unroll=min(8, tm))

    out = pl.pallas_call(
        kernel,
        out_shape=jax.ShapeDtypeStruct((M_pad, H_pad), w_dt),
        grid_spec=grid_spec,
        compiler_params=pltpu.CompilerParams(
            dimension_semantics=("parallel", "arbitrary"),
            vmem_limit_bytes=vmem_limit),
        cost_estimate=cost,
    )(ids_flat, table_p, wp_p, wtg, btg)

    # Note: for H << 128 this slice+reshape re-writes the output; keep padded
    # (M_pad, H_pad) layout downstream if consumers allow it.
    if M_pad != M or H_pad != H:
        out = out[:M, :H]
    return out.reshape(B, S, H)


def embedding_reference(ids, emb_table, wp, wt, bt, wg, bg):
    """Pure-JAX reference matching the PyTorch Embedding.forward."""
    x = jnp.take(emb_table, ids.reshape(-1), axis=0).astype(jnp.float32)
    x = x @ wp.astype(jnp.float32).T                     # Linear, no bias
    for l in range(wt.shape[0]):
        g = jax.nn.sigmoid(x @ wg[l].astype(jnp.float32).T + bg[l])
        t = jnp.maximum(x @ wt[l].astype(jnp.float32).T + bt[l], 0.0)
        x = g * t + (1.0 - g) * x
    B, S = ids.shape
    return x.reshape(B, S, -1).astype(wp.dtype)


if __name__ == "__main__":
    num_layers = 2
    vocab, emb_dim, hidden = 64, 48, 32

    key = jax.random.PRNGKey(0)
    k_ids, k_ids2, k_emb, k_wp, k_wt, k_bt, k_wg, k_bg = jax.random.split(key, 8)

    emb_table = jax.random.normal(k_emb, (vocab, emb_dim), dtype=jnp.float32)

    # nn.Linear-style U(-1/sqrt(fan_in), 1/sqrt(fan_in)) init.
    bp = 1.0 / (emb_dim ** 0.5)
    bh = 1.0 / (hidden ** 0.5)
    wp = jax.random.uniform(k_wp, (hidden, emb_dim), minval=-bp, maxval=bp,
                            dtype=jnp.float32)
    wt = jax.random.uniform(k_wt, (num_layers, hidden, hidden), minval=-bh,
                            maxval=bh, dtype=jnp.float32)
    bt = jax.random.uniform(k_bt, (num_layers, hidden), minval=-bh, maxval=bh,
                            dtype=jnp.float32)
    wg = jax.random.uniform(k_wg, (num_layers, hidden, hidden), minval=-bh,
                            maxval=bh, dtype=jnp.float32)
    bg = jax.random.uniform(k_bg, (num_layers, hidden), minval=-bh, maxval=bh,
                            dtype=jnp.float32)

    # Run 1: default config at the module's small shapes -> VMEM-resident table
    # fast path (in-VMEM gather, no DMA descriptors).
    batch, seq = 2, 8
    ids = jax.random.randint(k_ids, (batch, seq), 0, vocab, dtype=jnp.int32)
    out = embedding_forward(ids, emb_table, wp, wt, bt, wg, bg)
    out = jax.block_until_ready(out)
    ref = embedding_reference(ids, emb_table, wp, wt, bt, wg, bg)
    assert out.shape == (batch, seq, hidden)
    # Tolerance accounts for the EUP approximate reciprocal in the sigmoid.
    assert jnp.allclose(out, ref, atol=5e-3, rtol=5e-3), float(
        jnp.max(jnp.abs(out - ref)))

    # Run 2: force the HBM-gather path with a multi-step inner grid so the
    # cross-step double-buffered DMA pipeline (prime + prefetch) is exercised.
    batch2, seq2 = 4, 32
    ids2 = jax.random.randint(k_ids2, (batch2, seq2), 0, vocab, dtype=jnp.int32)
    out2 = embedding_forward(ids2, emb_table, wp, wt, bt, wg, bg,
                             tm=16, force_hbm_gather=True)
    out2 = jax.block_until_ready(out2)
    ref2 = embedding_reference(ids2, emb_table, wp, wt, bt, wg, bg)
    assert out2.shape == (batch2, seq2, hidden)
    assert jnp.allclose(out2, ref2, atol=5e-3, rtol=5e-3), float(
        jnp.max(jnp.abs(out2 - ref2)))

    print("KERNEL_OK")
</pallas_src>

<mosaic_0001>
module attributes {stable_mosaic.version = 11 : i64} {
  func.func @_probe(%arg0: i32, %arg1: memref<8x128xf32, #tpu.memory_space<vmem>>, %arg2: memref<8x128xf32, #tpu.memory_space<vmem>>) attributes {dimension_semantics = [#tpu.dimension_semantics<arbitrary>], iteration_bounds = array<i64: 1>, scalar_prefetch = 0 : i64, scratch_operands = 0 : i64, tpu.core_type = #tpu.core_type<tc>, window_params = [{pipeline_mode = #tpu.pipeline_mode<synchronous>, transform_indices = @transform_0, window_bounds = array<i64: 8, 128>}, {pipeline_mode = #tpu.pipeline_mode<synchronous>, transform_indices = @transform_1, window_bounds = array<i64: 8, 128>}]} {
    %c0 = arith.constant 0 : index
    %c0_0 = arith.constant 0 : index
    %0 = vector.load %arg1[%c0, %c0_0] : memref<8x128xf32, #tpu.memory_space<vmem>>, vector<8x128xf32>
    %cst = arith.constant 1.000000e+00 : f32
    %1 = vector.broadcast %cst : f32 to vector<8x128xf32>
    %2 = arith.addf %0, %1 : vector<8x128xf32>
    %c0_1 = arith.constant 0 : index
    %c0_2 = arith.constant 0 : index
    %3 = vector.load %arg2[%c0_1, %c0_2] : memref<8x128xf32, #tpu.memory_space<vmem>>, vector<8x128xf32>
    tpu.vector_store %arg2[%c0_1, %c0_2], %2 {strides = array<i32>} : memref<8x128xf32, #tpu.memory_space<vmem>>, vector<8x128xf32>,
    return
  }
  func.func @transform_0(%arg0: i32) -> (i32, i32) {
    %c0_i32 = arith.constant 0 : i32
    %c0_i32_0 = arith.constant 0 : i32
    %c0_i32_1 = arith.constant 0 : i32
    return %c0_i32, %c0_i32_0 : i32, i32
  }
  func.func @transform_1(%arg0: i32) -> (i32, i32) {
    %c0_i32 = arith.constant 0 : i32
    %c0_i32_0 = arith.constant 0 : i32
    %c0_i32_1 = arith.constant 0 : i32
    return %c0_i32, %c0_i32_0 : i32, i32
  }
}

module attributes {stable_mosaic.version = 11 : i64} {
  func.func @_embedding_kernel(%arg0: i32, %arg1: i32, %arg2: memref<16xi32, #tpu.memory_space<smem>>, %arg3: memref<64x128xf32, #tpu.memory_space<vmem>>, %arg4: memref<128x128xf32, #tpu.memory_space<vmem>>, %arg5: memref<2x256x128xf32, #tpu.memory_space<vmem>>, %arg6: memref<2x1x256xf32, #tpu.memory_space<vmem>>, %arg7: memref<8x128xf32, #tpu.memory_space<vmem>>, %arg8: memref<1x8x128xf32, #tpu.memory_space<vmem>>, %arg9: memref<2x!tpu.dma_semaphore, #tpu.memory_space<semaphore_mem>>) attributes {dimension_semantics = [#tpu.dimension_semantics<parallel>, #tpu.dimension_semantics<arbitrary>], iteration_bounds = array<i64: 2, 1>, scalar_prefetch = 1 : i64, scratch_operands = 2 : i64, tpu.core_type = #tpu.core_type<tc>, window_params = [{pipeline_mode = #tpu.pipeline_mode<synchronous>, transform_indices = @transform_0, window_bounds = array<i64: 64, 128>}, {pipeline_mode = #tpu.pipeline_mode<synchronous>, transform_indices = @transform_1, window_bounds = array<i64: 128, 128>}, {pipeline_mode = #tpu.pipeline_mode<synchronous>, transform_indices = @transform_2, window_bounds = array<i64: 2, 256, 128>}, {pipeline_mode = #tpu.pipeline_mode<synchronous>, transform_indices = @transform_3, window_bounds = array<i64: 2, 1, 256>}, {transform_indices = @transform_4, window_bounds = array<i64: 8, 128>}]} {
    %c1_i32 = arith.constant 1 : i32
    %0 = arith.muli %arg0, %c1_i32 : i32
    %1 = arith.addi %0, %arg1 : i32
    %c8_i32 = arith.constant 8 : i32
    %2 = arith.muli %1, %c8_i32 : i32
    %c0_i32 = arith.constant 0 : i32
    %3 = arith.addi %2, %c0_i32 : i32
    %4 = arith.index_cast %3 : i32 to index
    %5 = memref.load %arg2[%4] : memref<16xi32, #tpu.memory_space<smem>>
    %6 = arith.index_cast %5 : i32 to index
    %c0 = arith.constant 0 : index
    %7 = vector.load %arg3[%6, %c0] : memref<64x128xf32, #tpu.memory_space<vmem>>, vector<1x128xf32>
    %c0_0 = arith.constant 0 : index
    %8 = arith.index_cast %c0_i32 : i32 to index
    %c0_1 = arith.constant 0 : index
    %9 = vector.load %arg8[%c0_0, %8, %c0_1] : memref<1x8x128xf32, #tpu.memory_space<vmem>>, vector<1x1x128xf32>
    %10 = vector.shape_cast %9 : vector<1x1x128xf32> to vector<1x128xf32>
    %11 = vector.shape_cast %7 : vector<1x128xf32> to vector<1x1x128xf32>
    tpu.vector_store %arg8[%c0_0, %8, %c0_1], %11 {strides = array<i32>} : memref<1x8x128xf32, #tpu.memory_space<vmem>>, vector<1x1x128xf32>,
    %c1_i32_2 = arith.constant 1 : i32
    %12 = arith.addi %2, %c1_i32_2 : i32
    %13 = arith.index_cast %12 : i32 to index
    %14 = memref.load %arg2[%13] : memref<16xi32, #tpu.memory_space<smem>>
    %15 = arith.index_cast %14 : i32 to index
    %c0_3 = arith.constant 0 : index
    %16 = vector.load %arg3[%15, %c0_3] : memref<64x128xf32, #tpu.memory_space<vmem>>, vector<1x128xf32>
    %c0_4 = arith.constant 0 : index
    %17 = arith.index_cast %c1_i32_2 : i32 to index
    %c0_5 = arith.constant 0 : index
    %18 = vector.load %arg8[%c0_4, %17, %c0_5] : memref<1x8x128xf32, #tpu.memory_space<vmem>>, vector<1x1x128xf32>
    %19 = vector.shape_cast %18 : vector<1x1x128xf32> to vector<1x128xf32>
    %20 = vector.shape_cast %16 : vector<1x128xf32> to vector<1x1x128xf32>
    tpu.vector_store %arg8[%c0_4, %17, %c0_5], %20 {strides = array<i32>} : memref<1x8x128xf32, #tpu.memory_space<vmem>>, vector<1x1x128xf32>,
    %c2_i32 = arith.constant 2 : i32
    %21 = arith.addi %2, %c2_i32 : i32
    %22 = arith.index_cast %21 : i32 to index
    %23 = memref.load %arg2[%22] : memref<16xi32, #tpu.memory_space<smem>>
    %24 = arith.index_cast %23 : i32 to index
    %c0_6 = arith.constant 0 : index
    %25 = vector.load %arg3[%24, %c0_6] : memref<64x128xf32, #tpu.memory_space<vmem>>, vector<1x128xf32>
    %c0_7 = arith.constant 0 : index
    %26 = arith.index_cast %c2_i32 : i32 to index
    %c0_8 = arith.constant 0 : index
    %27 = vector.load %arg8[%c0_7, %26, %c0_8] : memref<1x8x128xf32, #tpu.memory_space<vmem>>, vector<1x1x128xf32>
    %28 = vector.shape_cast %27 : vector<1x1x128xf32> to vector<1x128xf32>
    %29 = vector.shape_cast %25 : vector<1x128xf32> to vector<1x1x128xf32>
    tpu.vector_store %arg8[%c0_7, %26, %c0_8], %29 {strides = array<i32>} : memref<1x8x128xf32, #tpu.memory_space<vmem>>, vector<1x1x128xf32>,
    %c3_i32 = arith.constant 3 : i32
    %30 = arith.addi %2, %c3_i32 : i32
    %31 = arith.index_cast %30 : i32 to index
    %32 = memref.load %arg2[%31] : memref<16xi32, #tpu.memory_space<smem>>
    %33 = arith.index_cast %32 : i32 to index
    %c0_9 = arith.constant 0 : index
    %34 = vector.load %arg3[%33, %c0_9] : memref<64x128xf32, #tpu.memory_space<vmem>>, vector<1x128xf32>
    %c0_10 = arith.constant 0 : index
    %35 = arith.index_cast %c3_i32 : i32 to index
    %c0_11 = arith.constant 0 : index
    %36 = vector.load %arg8[%c0_10, %35, %c0_11] : memref<1x8x128xf32, #tpu.memory_space<vmem>>, vector<1x1x128xf32>
    %37 = vector.shape_cast %36 : vector<1x1x128xf32> to vector<1x128xf32>
    %38 = vector.shape_cast %34 : vector<1x128xf32> to vector<1x1x128xf32>
    tpu.vector_store %arg8[%c0_10, %35, %c0_11], %38 {strides = array<i32>} : memref<1x8x128xf32, #tpu.memory_space<vmem>>, vector<1x1x128xf32>,
    %c4_i32 = arith.constant 4 : i32
    %39 = arith.addi %2, %c4_i32 : i32
    %40 = arith.index_cast %39 : i32 to index
    %41 = memref.load %arg2[%40] : memref<16xi32, #tpu.memory_space<smem>>
    %42 = arith.index_cast %41 : i32 to index
    %c0_12 = arith.constant 0 : index
    %43 = vector.load %arg3[%42, %c0_12] : memref<64x128xf32, #tpu.memory_space<vmem>>, vector<1x128xf32>
    %c0_13 = arith.constant 0 : index
    %44 = arith.index_cast %c4_i32 : i32 to index
    %c0_14 = arith.constant 0 : index
    %45 = vector.load %arg8[%c0_13, %44, %c0_14] : memref<1x8x128xf32, #tpu.memory_space<vmem>>, vector<1x1x128xf32>
    %46 = vector.shape_cast %45 : vector<1x1x128xf32> to vector<1x128xf32>
    %47 = vector.shape_cast %43 : vector<1x128xf32> to vector<1x1x128xf32>
    tpu.vector_store %arg8[%c0_13, %44, %c0_14], %47 {strides = array<i32>} : memref<1x8x128xf32, #tpu.memory_space<vmem>>, vector<1x1x128xf32>,
    %c5_i32 = arith.constant 5 : i32
    %48 = arith.addi %2, %c5_i32 : i32
    %49 = arith.index_cast %48 : i32 to index
    %50 = memref.load %arg2[%49] : memref<16xi32, #tpu.memory_space<smem>>
    %51 = arith.index_cast %50 : i32 to index
    %c0_15 = arith.constant 0 : index
    %52 = vector.load %arg3[%51, %c0_15] : memref<64x128xf32, #tpu.memory_space<vmem>>, vector<1x128xf32>
    %c0_16 = arith.constant 0 : index
    %53 = arith.index_cast %c5_i32 : i32 to index
    %c0_17 = arith.constant 0 : index
    %54 = vector.load %arg8[%c0_16, %53, %c0_17] : memref<1x8x128xf32, #tpu.memory_space<vmem>>, vector<1x1x128xf32>
    %55 = vector.shape_cast %54 : vector<1x1x128xf32> to vector<1x128xf32>
    %56 = vector.shape_cast %52 : vector<1x128xf32> to vector<1x1x128xf32>
    tpu.vector_store %arg8[%c0_16, %53, %c0_17], %56 {strides = array<i32>} : memref<1x8x128xf32, #tpu.memory_space<vmem>>, vector<1x1x128xf32>,
    %c6_i32 = arith.constant 6 : i32
    %57 = arith.addi %2, %c6_i32 : i32
    %58 = arith.index_cast %57 : i32 to index
    %59 = memref.load %arg2[%58] : memref<16xi32, #tpu.memory_space<smem>>
    %60 = arith.index_cast %59 : i32 to index
    %c0_18 = arith.constant 0 : index
    %61 = vector.load %arg3[%60, %c0_18] : memref<64x128xf32, #tpu.memory_space<vmem>>, vector<1x128xf32>
    %c0_19 = arith.constant 0 : index
    %62 = arith.index_cast %c6_i32 : i32 to index
    %c0_20 = arith.constant 0 : index
    %63 = vector.load %arg8[%c0_19, %62, %c0_20] : memref<1x8x128xf32, #tpu.memory_space<vmem>>, vector<1x1x128xf32>
    %64 = vector.shape_cast %63 : vector<1x1x128xf32> to vector<1x128xf32>
    %65 = vector.shape_cast %61 : vector<1x128xf32> to vector<1x1x128xf32>
    tpu.vector_store %arg8[%c0_19, %62, %c0_20], %65 {strides = array<i32>} : memref<1x8x128xf32, #tpu.memory_space<vmem>>, vector<1x1x128xf32>,
    %c7_i32 = arith.constant 7 : i32
    %66 = arith.addi %2, %c7_i32 : i32
    %67 = arith.index_cast %66 : i32 to index
    %68 = memref.load %arg2[%67] : memref<16xi32, #tpu.memory_space<smem>>
    %69 = arith.index_cast %68 : i32 to index
    %c0_21 = arith.constant 0 : index
    %70 = vector.load %arg3[%69, %c0_21] : memref<64x128xf32, #tpu.memory_space<vmem>>, vector<1x128xf32>
    %c0_22 = arith.constant 0 : index
    %71 = arith.index_cast %c7_i32 : i32 to index
    %c0_23 = arith.constant 0 : index
    %72 = vector.load %arg8[%c0_22, %71, %c0_23] : memref<1x8x128xf32, #tpu.memory_space<vmem>>, vector<1x1x128xf32>
    %73 = vector.shape_cast %72 : vector<1x1x128xf32> to vector<1x128xf32>
    %74 = vector.shape_cast %70 : vector<1x128xf32> to vector<1x1x128xf32>
    tpu.vector_store %arg8[%c0_22, %71, %c0_23], %74 {strides = array<i32>} : memref<1x8x128xf32, #tpu.memory_space<vmem>>, vector<1x1x128xf32>,
    %c8_i32_24 = arith.constant 8 : i32
    %c0_25 = arith.constant 0 : index
    %c0_26 = arith.constant 0 : index
    %c0_27 = arith.constant 0 : index
    %75 = vector.load %arg8[%c0_25, %c0_26, %c0_27] : memref<1x8x128xf32, #tpu.memory_space<vmem>>, vector<1x8x128xf32>
    %76 = vector.shape_cast %75 : vector<1x8x128xf32> to vector<8x128xf32>
    %c0_28 = arith.constant 0 : index
    %c0_29 = arith.constant 0 : index
    %77 = vector.load %arg4[%c0_28, %c0_29] : memref<128x128xf32, #tpu.memory_space<vmem>>, vector<128x128xf32>
    %cst = arith.constant dense<0.000000e+00> : vector<8x128xf32>
    %78 = tpu.matmul %76, %77, %cst {dimension_numbers = #tpu.dot_dimension_numbers<[1], [1], [0], [0], [0, 0, 1, 0], [], []>} : vector<8x128xf32>, vector<128x128xf32>, vector<8x128xf32> -> vector<8x128xf32>
    %c0_30 = arith.constant 0 : index
    %c0_31 = arith.constant 0 : index
    %c0_32 = arith.constant 0 : index
    %79 = vector.load %arg5[%c0_30, %c0_31, %c0_32] : memref<2x256x128xf32, #tpu.memory_space<vmem>>, vector<1x256x128xf32>
    %80 = vector.shape_cast %79 : vector<1x256x128xf32> to vector<256x128xf32>
    %cst_33 = arith.constant dense<0.000000e+00> : vector<8x256xf32>
    %81 = tpu.matmul %78, %80, %cst_33 {dimension_numbers = #tpu.dot_dimension_numbers<[1], [1], [0], [0], [0, 0, 1, 0], [], []>} : vector<8x128xf32>, vector<256x128xf32>, vector<8x256xf32> -> vector<8x256xf32>
    %c0_34 = arith.constant 0 : index
    %c0_35 = arith.constant 0 : index
    %c0_36 = arith.constant 0 : index
    %82 = vector.load %arg6[%c0_34, %c0_35, %c0_36] : memref<2x1x256xf32, #tpu.memory_space<vmem>>, vector<1x1x256xf32>
    %83 = vector.shape_cast %82 : vector<1x1x256xf32> to vector<1x256xf32>
    %84 = vector.broadcast %83 : vector<1x256xf32> to vector<8x256xf32>
    %85 = arith.addf %81, %84 : vector<8x256xf32>
    %86 = vector.extract_strided_slice %85 {offsets = [0, 0], sizes = [8, 128], strides = [1, 1]} : vector<8x256xf32> to vector<8x128xf32>
    %cst_37 = arith.constant 0.000000e+00 : f32
    %87 = vector.broadcast %cst_37 : f32 to vector<8x128xf32>
    %88 = arith.maximumf %86, %87 : vector<8x128xf32>
    %89 = vector.extract_strided_slice %85 {offsets = [0, 128], sizes = [8, 128], strides = [1, 1]} : vector<8x256xf32> to vector<8x128xf32>
    %cst_38 = arith.constant 0.000000e+00 : f32
    %90 = vector.broadcast %cst_38 : f32 to vector<8x128xf32>
    %91 = arith.subf %90, %89 : vector<8x128xf32>
    %92 = math.exp %91 : vector<8x128xf32>
    %cst_39 = arith.constant 1.000000e+00 : f32
    %93 = vector.broadcast %cst_39 : f32 to vector<8x128xf32>
    %94 = arith.addf %93, %92 : vector<8x128xf32>
    %95 = tpu.reciprocal %94 {approx = true} : vector<8x128xf32> -> vector<8x128xf32>
    %96 = arith.subf %88, %78 : vector<8x128xf32>
    %97 = arith.mulf %95, %96 : vector<8x128xf32>
    %98 = arith.addf %78, %97 : vector<8x128xf32>
    %c1 = arith.constant 1 : index
    %c0_40 = arith.constant 0 : index
    %c0_41 = arith.constant 0 : index
    %99 = vector.load %arg5[%c1, %c0_40, %c0_41] : memref<2x256x128xf32, #tpu.memory_space<vmem>>, vector<1x256x128xf32>
    %100 = vector.shape_cast %99 : vector<1x256x128xf32> to vector<256x128xf32>
    %cst_42 = arith.constant dense<0.000000e+00> : vector<8x256xf32>
    %101 = tpu.matmul %98, %100, %cst_42 {dimension_numbers = #tpu.dot_dimension_numbers<[1], [1], [0], [0], [0, 0, 1, 0], [], []>} : vector<8x128xf32>, vector<256x128xf32>, vector<8x256xf32> -> vector<8x256xf32>
    %c1_43 = arith.constant 1 : index
    %c0_44 = arith.constant 0 : index
    %c0_45 = arith.constant 0 : index
    %102 = vector.load %arg6[%c1_43, %c0_44, %c0_45] : memref<2x1x256xf32, #tpu.memory_space<vmem>>, vector<1x1x256xf32>
    %103 = vector.shape_cast %102 : vector<1x1x256xf32> to vector<1x256xf32>
    %104 = vector.broadcast %103 : vector<1x256xf32> to vector<8x256xf32>
    %105 = arith.addf %101, %104 : vector<8x256xf32>
    %106 = vector.extract_strided_slice %105 {offsets = [0, 0], sizes = [8, 128], strides = [1, 1]} : vector<8x256xf32> to vector<8x128xf32>
    %cst_46 = arith.constant 0.000000e+00 : f32
    %107 = vector.broadcast %cst_46 : f32 to vector<8x128xf32>
    %108 = arith.maximumf %106, %107 : vector<8x128xf32>
    %109 = vector.extract_strided_slice %105 {offsets = [0, 128], sizes = [8, 128], strides = [1, 1]} : vector<8x256xf32> to vector<8x128xf32>
    %cst_47 = arith.constant 0.000000e+00 : f32
    %110 = vector.broadcast %cst_47 : f32 to vector<8x128xf32>
    %111 = arith.subf %110, %109 : vector<8x128xf32>
    %112 = math.exp %111 : vector<8x128xf32>
    %cst_48 = arith.constant 1.000000e+00 : f32
    %113 = vector.broadcast %cst_48 : f32 to vector<8x128xf32>
    %114 = arith.addf %113, %112 : vector<8x128xf32>
    %115 = tpu.reciprocal %114 {approx = true} : vector<8x128xf32> -> vector<8x128xf32>
    %116 = arith.subf %108, %98 : vector<8x128xf32>
    %117 = arith.mulf %115, %116 : vector<8x128xf32>
    %118 = arith.addf %98, %117 : vector<8x128xf32>
    %c0_49 = arith.constant 0 : index
    %c0_50 = arith.constant 0 : index
    %119 = vector.load %arg7[%c0_49, %c0_50] : memref<8x128xf32, #tpu.memory_space<vmem>>, vector<8x128xf32>
    tpu.vector_store %arg7[%c0_49, %c0_50], %118 {strides = array<i32>} : memref<8x128xf32, #tpu.memory_space<vmem>>, vector<8x128xf32>,
    return
  }
  func.func @transform_0(%arg0: i32, %arg1: i32, %arg2: memref<16xi32, #tpu.memory_space<smem>>) -> (i32, i32) {
    %c0_i32 = arith.constant 0 : i32
    %c0_i32_0 = arith.constant 0 : i32
    %c0_i32_1 = arith.constant 0 : i32
    return %c0_i32, %c0_i32_0 : i32, i32
  }
  func.func @transform_1(%arg0: i32, %arg1: i32, %arg2: memref<16xi32, #tpu.memory_space<smem>>) -> (i32, i32) {
    %c0_i32 = arith.constant 0 : i32
    %c0_i32_0 = arith.constant 0 : i32
    %c0_i32_1 = arith.constant 0 : i32
    return %c0_i32, %c0_i32_0 : i32, i32
  }
  func.func @transform_2(%arg0: i32, %arg1: i32, %arg2: memref<16xi32, #tpu.memory_space<smem>>) -> (i32, i32, i32) {
    %c0_i32 = arith.constant 0 : i32
    %c0_i32_0 = arith.constant 0 : i32
    %c0_i32_1 = arith.constant 0 : i32
    %c0_i32_2 = arith.constant 0 : i32
    return %c0_i32, %c0_i32_0, %c0_i32_1 : i32, i32, i32
  }
  func.func @transform_3(%arg0: i32, %arg1: i32, %arg2: memref<16xi32, #tpu.memory_space<smem>>) -> (i32, i32, i32) {
    %c0_i32 = arith.constant 0 : i32
    %c0_i32_0 = arith.constant 0 : i32
    %c0_i32_1 = arith.constant 0 : i32
    %c0_i32_2 = arith.constant 0 : i32
    return %c0_i32, %c0_i32_0, %c0_i32_1 : i32, i32, i32
  }
  func.func @transform_4(%arg0: i32, %arg1: i32, %arg2: memref<16xi32, #tpu.memory_space<smem>>) -> (i32, i32) {
    %c1_i32 = arith.constant 1 : i32
    %0 = arith.muli %arg0, %c1_i32 : i32
    %1 = arith.addi %0, %arg1 : i32
    %c0_i32 = arith.constant 0 : i32
    %c0_i32_0 = arith.constant 0 : i32
    return %1, %c0_i32 : i32, i32
  }
}

</mosaic_0001>

<llo_original>
// kernel: tpu_custom_call.1
$region0: #{tpu_custom_call.1}
  #allocation0 [shape = 'u32[]', space=smem, size = 0x4, offset = 0x4, fixed_abs, tag = 'smem constant byte address 0x4 - core index']
  #allocation1 [shape = 'u32[72,128]{1,0:T(1,128)}', space=vmem, size = 0x9000, scoped, tag = 'internal scratch']
  %s0 = inlined_call_operand.hbm [shape: f32[8,128], index: 0, kind: input, shape index: {}]
  %s1 = inlined_call_operand.hbm [shape: f32[8,128], index: 1, kind: output, shape index: {}]
  %s2 = sld [smem:[#allocation0]]
  $region18: #{tpu_custom_call.1} parent=0
    _
  %s4 = ssub.s32 1, %s2
  %s5 = scalar_select 0, %s4, %s2
  $region1: #{tpu_custom_call.1} parent=0
    #allocation2 [shape = 'u8[4096]{0}', space=vmem, size = 0x1000, scoped, tag = 'input window, operand 0, single buffered']
    #allocation3 [shape = 's32[1]{0}', space=sflag, size = 0x4, scoped, tag = 'scoped memory for tpu_custom_call.1']
    #allocation4 [shape = 's32[1]{0}', space=sflag, size = 0x4, scoped, tag = 'scoped memory for tpu_custom_call.1']
    #allocation5 [shape = 'u8[4096]{0}', space=vmem, size = 0x1000, scoped, tag = 'output window, operand 0, single buffered']
    %6 = vsyncpa [#allocation3], 0
    %7 = vsyncpa [#allocation4], 0
    // Predicated region
    $region2: #{tpu_custom_call.1} parent=1 // pred_check
      _
    $region3: #{tpu_custom_call.1} parent=1 // pred_check_branch
      %9 = sbr.rel (0) target = $region5
    $region4: #{tpu_custom_call.1} parent=1 // pred_region
      %11 = vsyncadd [#allocation3], 0
      %s13 = sshll.u32 %s0, 4
      %s14 = int_to_ptr.hbm [resolvable:$true] %s13
      %s15 = sshll.u32 [#allocation2], 4
      %s16 = int_to_ptr.vmem [resolvable:$true] %s15
      %18 = dma.hbm_to_vmem [thread:$0]  %s14, 128, %s16, [#allocation3]
    $region5: #{tpu_custom_call.1} parent=1 // pred_fallthru
      _
    // Predicated region
    $region6: #{tpu_custom_call.1} parent=1 // pred_check
      _
    $region7: #{tpu_custom_call.1} parent=1 // pred_check_branch
      %20 = sbr.rel (0) target = $region9
    $region8: #{tpu_custom_call.1} parent=1 // pred_region
      %22 = dma.done [#allocation3], 128
    $region9: #{tpu_custom_call.1} parent=1 // pred_fallthru
      _
    %v23 = vld [vmem:[#allocation2] sm:$0xff]
    %v24 = vadd.f32 %v23, 1.0
    %25 = vst [vmem:[#allocation5] sm:$0xff] %v24
    // Predicated region
    $region10: #{tpu_custom_call.1} parent=1 // pred_check
      _
    $region11: #{tpu_custom_call.1} parent=1 // pred_check_branch
      %27 = sbr.rel (0) target = $region13
    $region12: #{tpu_custom_call.1} parent=1 // pred_region
      %29 = vsyncadd [#allocation4], 0
      %s31 = sshll.u32 [#allocation5], 4
      %s32 = int_to_ptr.vmem [resolvable:$true] %s31
      %s33 = sshll.u32 %s1, 4
      %s34 = int_to_ptr.hbm [resolvable:$true] %s33
      %36 = dma.vmem_to_hbm [thread:$0]  %s32, 128, %s34, [#allocation4]
    $region13: #{tpu_custom_call.1} parent=1 // pred_fallthru
      _
    // Predicated region
    $region14: #{tpu_custom_call.1} parent=1 // pred_check
      _
    $region15: #{tpu_custom_call.1} parent=1 // pred_check_branch
      %38 = sbr.rel (0) target = $region17
    $region16: #{tpu_custom_call.1} parent=1 // pred_region
      %40 = dma.done [#allocation4], 128
    $region17: #{tpu_custom_call.1} parent=1 // pred_fallthru
      _
    %41 = vsyncpa [#allocation3], 1
    %42 = vsyncpa [#allocation4], 1

// kernel: tpu_custom_call.1
$region0: #{tpu_custom_call.1}
  #allocation0 [shape = 'u32[]', space=smem, size = 0x4, offset = 0x4, fixed_abs, tag = 'smem constant byte address 0x4 - core index']
  #allocation1 [shape = 'u32[72,128]{1,0:T(1,128)}', space=vmem, size = 0x9000, scoped, tag = 'internal scratch']
  #allocation2 [shape = 'f32[1,8,128]{2,1,0:T(8,128)}', space=vmem, size = 0x1000, scoped, tag = 'scratch operand']
  #allocation3 [shape = 's32[2]{0}', space=sflag, size = 0x8, scoped, tag = 'scratch operand']
  #allocation4 [shape = 's32[1]{0}', space=sflag, size = 0x4, scoped, tag = 'scoped memory for tpu_custom_call.1']
  #allocation5 [shape = 'u8[512]{0}', space=smem, size = 0x200, scoped, tag = 'prefetched SMEM operand 0']
  %s0 = inlined_call_operand.hbm [shape: s32[16], index: 0, kind: input, shape index: {}]
  %s1 = inlined_call_operand.hbm [shape: f32[64,128], index: 1, kind: input, shape index: {}]
  %s2 = inlined_call_operand.hbm [shape: f32[128,128], index: 2, kind: input, shape index: {}]
  %s3 = inlined_call_operand.hbm [shape: f32[2,256,128], index: 3, kind: input, shape index: {}]
  %s4 = inlined_call_operand.hbm [shape: f32[2,1,256], index: 4, kind: input, shape index: {}]
  %s5 = inlined_call_operand.hbm [shape: f32[16,128], index: 5, kind: output, shape index: {}]
  %s6 = sld [smem:[#allocation0]]
  $region65: #{tpu_custom_call.1} parent=0
    _
  %s8 = ssub.s32 1, %s6
  %s9 = scalar_select 0, %s8, %s6
  %s11 = sshll.u32 %s0, 4
  %s12 = int_to_ptr.hbm [resolvable:$true] %s11
  %14 = dma.hbm_to_smem %s12, 16, [#allocation5], [#allocation4]
  %16 = dma.done [#allocation4], 16
  %17 = sfence
  $region1: #{tpu_custom_call.1} parent=0
    #allocation6 [shape = 'u8[32768]{0}', space=vmem, size = 0x8000, scoped, tag = 'input window, operand 1, single buffered']
    #allocation7 [shape = 's32[2]{0}', space=sflag, size = 0x8, scoped, tag = 'scoped memory for tpu_custom_call.1']
    #allocation8 [shape = 's32[2]{0}', space=sflag, size = 0x8, scoped, tag = 'scoped memory for tpu_custom_call.1']
    #allocation9 [shape = 'u8[65536]{0}', space=vmem, size = 0x10000, scoped, tag = 'input window, operand 2, single buffered']
    #allocation10 [shape = 's32[1]{0}', space=sflag, size = 0x4, scoped, tag = 'scoped memory for tpu_custom_call.1']
    #allocation11 [shape = 'u8[262144]{0}', space=vmem, size = 0x40000, scoped, tag = 'input window, operand 3, single buffered']
    #allocation12 [shape = 'u8[2048]{0}', space=vmem, size = 0x800, scoped, tag = 'input window, operand 4, single buffered']
    #allocation13 [shape = 's32[1]{0}', space=sflag, size = 0x4, scoped, tag = 'scoped memory for tpu_custom_call.1']
    #allocation14 [shape = 'u8[8192]{0}', space=vmem, size = 0x2000, scoped, tag = 'output window, operand 0']
    %18 = vsyncpa [#allocation7], 0
    %19 = vsyncpa [#allocation10], 0
    %20 = vsyncpa [#allocation13], 0
    %21 = vsyncpa [#allocation8], 0
    %s22 = scalar_lea.sflag [#allocation8], 1
    %23 = vsyncpa %s22, 0
    loop: start=0, step=1, limit=4
    $region2: #{tpu_custom_call.1} parent=1 // loop_pre_header
      _
    $region3: #{tpu_custom_call.1} parent=1 // loop_header
      %s25 = sphi 0, %s29
      %p26 = scmp.ge.s32.totalorder %s25, 4
      %s32 = sphi 0, %s44
      %s33 = sphi 0, %s40
      %s34 = sphi 0, %s32
      %s35 = sphi 0, %s33
      %s36 = sphi 0, %s34
      %s37 = sphi 0, %s35
      %s45 = sphi 0, %s45
      %s47 = sphi 0, %s45
      %s48 = sphi 0, %s47
      %s62 = sphi 0, %s48
      %s66 = sphi 0, %s66
      %s68 = sphi 0, %s66
      %s69 = sphi 0, %s68
      %s83 = sphi 0, %s69
      %s87 = sphi 0, %s87
      %s89 = sphi 0, %s87
      %s90 = sphi 0, %s89
      %s104 = sphi 0, %s90
      %s108 = sphi 0, %s108
      %s110 = sphi 0, %s108
      %s111 = sphi 0, %s110
      %s125 = sphi 0, %s111
      %s133 = sphi 0, %s135
      %s136 = sphi 0, %s133
      %s137 = sphi 0, %s136
      %s153 = sphi 0, %s137
    $region4: #{tpu_custom_call.1} parent=1 // loop_header_branch
      %28 = sbr.rel (%p26) target = $region8
    $region5: #{tpu_custom_call.1} parent=1 // loop_body
      %s30 = ssub.s32 %s25, 1
      %s31 = ssub.s32 %s25, 2
      %s38 = sadd.s32 1, %s33
      %p39 = scmp.ge.s32.totalorder %s38, 1
      %s40 = scalar_select %p39, 0, %s38
      %s41 = sadd.s32 1, %s32
      %s42 = scalar_select %p39, %s41, %s32
      %p43 = scmp.ge.s32.totalorder %s42, 2
      %s44 = scalar_select %p43, 0, %s42
      %s46 = sadd.s32 %s45, 1
      %p49 = scmp.eq.s32.totalorder %s25, 1
      %p50 = scmp.ne.s32.totalorder %s45, %s47
      %p51 = scmp.eq.s32.totalorder %s25, 0
      %p52 = por %p50, %p51
      %p53 = scmp.ne.s32.totalorder %s45, %s47
      %p54 = scmp.eq.s32.totalorder %s30, 1
      %p55 = por %p53, %p54
      %p56 = scmp.ne.s32.totalorder %s47, %s48
      %p57 = scmp.eq.s32.totalorder %s30, 0
      %p58 = por %p56, %p57
      %p59 = scmp.ne.s32.totalorder %s47, %s48
      %p60 = scmp.eq.s32.totalorder %s31, 1
      %p61 = por %p59, %p60
      %p63 = scmp.ne.s32.totalorder %s48, %s62
      %p64 = scmp.eq.s32.totalorder %s31, 0
      %p65 = por %p63, %p64
      %s67 = sadd.s32 %s66, 1
      %p70 = scmp.eq.s32.totalorder %s25, 1
      %p71 = scmp.ne.s32.totalorder %s66, %s68
      %p72 = scmp.eq.s32.totalorder %s25, 0
      %p73 = por %p71, %p72
      %p74 = scmp.ne.s32.totalorder %s66, %s68
      %p75 = scmp.eq.s32.totalorder %s30, 1
      %p76 = por %p74, %p75
      %p77 = scmp.ne.s32.totalorder %s68, %s69
      %p78 = scmp.eq.s32.totalorder %s30, 0
      %p79 = por %p77, %p78
      %p80 = scmp.ne.s32.totalorder %s68, %s69
      %p81 = scmp.eq.s32.totalorder %s31, 1
      %p82 = por %p80, %p81
      %p84 = scmp.ne.s32.totalorder %s69, %s83
      %p85 = scmp.eq.s32.totalorder %s31, 0
      %p86 = por %p84, %p85
      %s88 = sadd.s32 %s87, 1
      %p91 = scmp.eq.s32.totalorder %s25, 1
      %p92 = scmp.ne.s32.totalorder %s87, %s89
      %p93 = scmp.eq.s32.totalorder %s25, 0
      %p94 = por %p92, %p93
      %p95 = scmp.ne.s32.totalorder %s87, %s89
      %p96 = scmp.eq.s32.totalorder %s30, 1
      %p97 = por %p95, %p96
      %p98 = scmp.ne.s32.totalorder %s89, %s90
      %p99 = scmp.eq.s32.totalorder %s30, 0
      %p100 = por %p98, %p99
      %p101 = scmp.ne.s32.totalorder %s89, %s90
      %p102 = scmp.eq.s32.totalorder %s31, 1
      %p103 = por %p101, %p102
      %p105 = scmp.ne.s32.totalorder %s90, %s104
      %p106 = scmp.eq.s32.totalorder %s31, 0
      %p107 = por %p105, %p106
      %s109 = sadd.s32 %s108, 1
      %p112 = scmp.eq.s32.totalorder %s25, 1
      %p113 = scmp.ne.s32.totalorder %s108, %s110
      %p114 = scmp.eq.s32.totalorder %s25, 0
      %p115 = por %p113, %p114
      %p116 = scmp.ne.s32.totalorder %s108, %s110
      %p117 = scmp.eq.s32.totalorder %s30, 1
      %p118 = por %p116, %p117
      %p119 = scmp.ne.s32.totalorder %s110, %s111
      %p120 = scmp.eq.s32.totalorder %s30, 0
      %p121 = por %p119, %p120
      %p122 = scmp.ne.s32.totalorder %s110, %s111
      %p123 = scmp.eq.s32.totalorder %s31, 1
      %p124 = por %p122, %p123
      %p126 = scmp.ne.s32.totalorder %s111, %s125
      %p127 = scmp.eq.s32.totalorder %s31, 0
      %p128 = por %p126, %p127
      %s129 = sadd.s32 %s32, %s33
      %s130 = sadd.s32 %s44, %s40
      %s131 = ssub.s32 %s129, %s130
      %p132 = scmp.eq.s32.totalorder %s131, 0
      %s134 = sadd.s32 %s133, 1
      %s135 = scalar_select %p132, %s133, %s134
      %p138 = pneg %p132
      %p139 = scmp.eq.s32.totalorder %s25, 1
      %p140 = por %p138, %p139
      %p141 = scmp.ne.s32.totalorder %s133, %s136
      %p142 = scmp.eq.s32.totalorder %s25, 0
      %p143 = por %p141, %p142
      %p144 = scmp.ne.s32.totalorder %s133, %s136
      %p145 = scmp.eq.s32.totalorder %s30, 1
      %p146 = por %p144, %p145
      %p147 = scmp.ne.s32.totalorder %s136, %s137
      %p148 = scmp.eq.s32.totalorder %s30, 0
      %p149 = por %p147, %p148
      %p150 = scmp.ne.s32.totalorder %s136, %s137
      %p151 = scmp.eq.s32.totalorder %s31, 1
      %p152 = por %p150, %p151
      %p154 = scmp.ne.s32.totalorder %s137, %s153
      %p155 = scmp.eq.s32.totalorder %s31, 0
      %p156 = por %p154, %p155
      %p157 = scmp.le.s32.totalorder 1, %s25
      %p158 = scmp.lt.s32.totalorder %s25, 3
      %p159 = pnand %p157, %p158
      %p160 = pneg %p159
      // Predicated region
      $region9: #{tpu_custom_call.1} parent=5 // pred_check
        _
      $region10: #{tpu_custom_call.1} parent=5 // pred_check_branch
        %162 = sbr.rel (%p159) target = $region12
      $region11: #{tpu_custom_call.1} parent=5 // pred_region
        %s163 = ssub.s32 %s25, 1
        // Predicated region
        $region13: #{tpu_custom_call.1} parent=11 // pred_check
          %p164 = pneg %p58
        $region14: #{tpu_custom_call.1} parent=11 // pred_check_branch
          %166 = sbr.rel (%p164) target = $region16
        $region15: #{tpu_custom_call.1} parent=11 // pred_region
          %168 = vsyncadd [#allocation7], 0
          %s169 = sshll.u32 %s1, 4
          %s170 = int_to_ptr.hbm [resolvable:$true] %s169
          %s171 = sshll.u32 [#allocation6], 4
          %s172 = int_to_ptr.vmem [resolvable:$true] %s171
          %177 = dma.hbm_to_vmem [thread:$0]  %s170, 1024, %s172, [#allocation7], 128, 128, 8
        $region16: #{tpu_custom_call.1} parent=11 // pred_fallthru
          _
        // Predicated region
        $region17: #{tpu_custom_call.1} parent=11 // pred_check
          %p178 = pneg %p79
        $region18: #{tpu_custom_call.1} parent=11 // pred_check_branch
          %180 = sbr.rel (%p178) target = $region20
        $region19: #{tpu_custom_call.1} parent=11 // pred_region
          %182 = vsyncadd [#allocation10], 0
          %s183 = sshll.u32 %s2, 4
          %s184 = int_to_ptr.hbm [resolvable:$true] %s183
          %s185 = sshll.u32 [#allocation9], 4
          %s186 = int_to_ptr.vmem [resolvable:$true] %s185
          %191 = dma.hbm_to_vmem [thread:$0]  %s184, 2048, %s186, [#allocation10], 128, 128, 8
        $region20: #{tpu_custom_call.1} parent=11 // pred_fallthru
          _
        // Predicated region
        $region21: #{tpu_custom_call.1} parent=11 // pred_check
          %p192 = pneg %p100
        $region22: #{tpu_custom_call.1} parent=11 // pred_check_branch
          %194 = sbr.rel (%p192) target = $region24
        $region23: #{tpu_custom_call.1} parent=11 // pred_region
          %196 = vsyncadd [#allocation10], 0
          %s197 = sshll.u32 %s3, 4
          %s198 = int_to_ptr.hbm [resolvable:$true] %s197
          %s199 = sshll.u32 [#allocation11], 4
          %s200 = int_to_ptr.vmem [resolvable:$true] %s199
          %205 = dma.hbm_to_vmem [thread:$0]  %s198, 8192, %s200, [#allocation10], 128, 128, 8
        $region24: #{tpu_custom_call.1} parent=11 // pred_fallthru
          _
        // Predicated region
        $region25: #{tpu_custom_call.1} parent=11 // pred_check
          %p206 = pneg %p121
        $region26: #{tpu_custom_call.1} parent=11 // pred_check_branch
          %208 = sbr.rel (%p206) target = $region28
        $region27: #{tpu_custom_call.1} parent=11 // pred_region
          %210 = vsyncadd [#allocation13], 0
          %s211 = sshll.u32 %s4, 4
          %s212 = int_to_ptr.hbm [resolvable:$true] %s211
          %s213 = sshll.u32 [#allocation12], 4
          %s214 = int_to_ptr.vmem [resolvable:$true] %s213
          %219 = dma.hbm_to_vmem [thread:$0]  %s212, 64, %s214, [#allocation13], 32, 32, 2
        $region28: #{tpu_custom_call.1} parent=11 // pred_fallthru
          _
      $region12: #{tpu_custom_call.1} parent=5 // pred_fallthru
        _
      %p220 = scmp.lt.s32.totalorder %s25, 2
      // Predicated region
      $region29: #{tpu_custom_call.1} parent=5 // pred_check
        %p221 = pneg %p220
      $region30: #{tpu_custom_call.1} parent=5 // pred_check_branch
        %223 = sbr.rel (%p221) target = $region32
      $region31: #{tpu_custom_call.1} parent=5 // pred_region
        _
      $region32: #{tpu_custom_call.1} parent=5 // pred_fallthru
        _
      %p224 = scmp.le.s32.totalorder 1, %s25
      %p225 = scmp.lt.s32.totalorder %s25, 3
      %p226 = pnand %p224, %p225
      %p227 = pneg %p226
      // Predicated region
      $region33: #{tpu_custom_call.1} parent=5 // pred_check
        _
      $region34: #{tpu_custom_call.1} parent=5 // pred_check_branch
        %229 = sbr.rel (%p226) target = $region36
      $region35: #{tpu_custom_call.1} parent=5 // pred_region
        %s230 = ssub.s32 %s25, 1
        // Predicated region
        $region37: #{tpu_custom_call.1} parent=35 // pred_check
          %p231 = pneg %p58
        $region38: #{tpu_custom_call.1} parent=35 // pred_check_branch
          %233 = sbr.rel (%p231) target = $region40
        $region39: #{tpu_custom_call.1} parent=35 // pred_region
          %235 = dma.done [#allocation7], 1024
        $region40: #{tpu_custom_call.1} parent=35 // pred_fallthru
          _
        // Predicated region
        $region41: #{tpu_custom_call.1} parent=35 // pred_check
          %p236 = pneg %p79
        $region42: #{tpu_custom_call.1} parent=35 // pred_check_branch
          %238 = sbr.rel (%p236) target = $region44
        $region43: #{tpu_custom_call.1} parent=35 // pred_region
          %240 = dma.done [#allocation10], 2048
        $region44: #{tpu_custom_call.1} parent=35 // pred_fallthru
          _
        // Predicated region
        $region45: #{tpu_custom_call.1} parent=35 // pred_check
          %p241 = pneg %p100
        $region46: #{tpu_custom_call.1} parent=35 // pred_check_branch
          %243 = sbr.rel (%p241) target = $region48
        $region47: #{tpu_custom_call.1} parent=35 // pred_region
          %245 = dma.done [#allocation10], 8192
        $region48: #{tpu_custom_call.1} parent=35 // pred_fallthru
          _
        // Predicated region
        $region49: #{tpu_custom_call.1} parent=35 // pred_check
          %p246 = pneg %p121
        $region50: #{tpu_custom_call.1} parent=35 // pred_check_branch
          %248 = sbr.rel (%p246) target = $region52
        $region51: #{tpu_custom_call.1} parent=35 // pred_region
          %250 = dma.done [#allocation13], 64
        $region52: #{tpu_custom_call.1} parent=35 // pred_fallthru
          _
        %p251 = pneg %p58
        %p252 = pneg %p55
        %p253 = pneg %p79
        %p254 = pneg %p76
        %p255 = pneg %p100
        %p256 = pneg %p97
        %p257 = pneg %p121
        %p258 = pneg %p118
        %p259 = pneg %p149
        %p260 = pneg %p146
        %s261 = sand.u32 %s136, 1
        %s262 = scalar_lea.sflag [#allocation8], %s261
        %s263 = sand.u32 %s136, 1
        %s264 = smul.addr %s263, 8
        %s265 = scalar_lea.vmem [#allocation14], %s264
        %s266 = sadd.s32 %s34, %s35
        %s267 = sadd.s32 %s34, %s35
        %s268 = smul.u32 %s267, 8
        %s269 = sld [smem:[#allocation5 + %s268]]
        %s270 = scalar_lea.vmem [#allocation6], %s269
        %v271 = vld [vmem:[%s270] sm:$0x1]
        %272 = vst [vmem:[#allocation2] sm:$0x1] %v271
        %s273 = sadd.s32 %s268, 1
        %s274 = sld [smem:[#allocation5 + %s273]]
        %s275 = scalar_lea.vmem [#allocation6], %s274
        %v276 = vld [vmem:[%s275] sm:$0x1]
        %277 = vst [vmem:[#allocation2 + $0x1] sm:$0x1] %v276
        %s278 = sadd.s32 %s268, 2
        %s279 = sld [smem:[#allocation5 + %s278]]
        %s280 = scalar_lea.vmem [#allocation6], %s279
        %v281 = vld [vmem:[%s280] sm:$0x1]
        %282 = vst [vmem:[#allocation2 + $0x2] sm:$0x1] %v281
        %s283 = sadd.s32 %s268, 3
        %s284 = sld [smem:[#allocation5 + %s283]]
        %s285 = scalar_lea.vmem [#allocation6], %s284
        %v286 = vld [vmem:[%s285] sm:$0x1]
        %287 = vst [vmem:[#allocation2 + $0x3] sm:$0x1] %v286
        %s288 = sadd.s32 %s268, 4
        %s289 = sld [smem:[#allocation5 + %s288]]
        %s290 = scalar_lea.vmem [#allocation6], %s289
        %v291 = vld [vmem:[%s290] sm:$0x1]
        %292 = vst [vmem:[#allocation2 + $0x4] sm:$0x1] %v291
        %s293 = sadd.s32 %s268, 5
        %s294 = sld [smem:[#allocation5 + %s293]]
        %s295 = scalar_lea.vmem [#allocation6], %s294
        %v296 = vld [vmem:[%s295] sm:$0x1]
        %297 = vst [vmem:[#allocation2 + $0x5] sm:$0x1] %v296
        %s298 = sadd.s32 %s268, 6
        %s299 = sld [smem:[#allocation5 + %s298]]
        %s300 = scalar_lea.vmem [#allocation6], %s299
        %v301 = vld [vmem:[%s300] sm:$0x1]
        %302 = vst [vmem:[#allocation2 + $0x6] sm:$0x1] %v301
        %s303 = sadd.s32 %s268, 7
        %s304 = sld [smem:[#allocation5 + %s303]]
        %s305 = scalar_lea.vmem [#allocation6], %s304
        %v306 = vld [vmem:[%s305] sm:$0x1]
        %307 = vst [vmem:[#allocation2 + $0x7] sm:$0x1] %v306
        %v308 = vld [vmem:[#allocation2] sm:$0xff]
        %v309 = vld [vmem:[#allocation9] sm:$0xff]
        %v310 = vld [vmem:[#allocation9 + $0x8] sm:$0xff]
        %v311 = vld [vmem:[#allocation9 + $0x10] sm:$0xff]
        %v312 = vld [vmem:[#allocation9 + $0x18] sm:$0xff]
        %v313 = vld [vmem:[#allocation9 + $0x20] sm:$0xff]
        %v314 = vld [vmem:[#allocation9 + $0x28] sm:$0xff]
        %v315 = vld [vmem:[#allocation9 + $0x30] sm:$0xff]
        %v316 = vld [vmem:[#allocation9 + $0x38] sm:$0xff]
        %v317 = vld [vmem:[#allocation9 + $0x40] sm:$0xff]
        %v318 = vld [vmem:[#allocation9 + $0x48] sm:$0xff]
        %v319 = vld [vmem:[#allocation9 + $0x50] sm:$0xff]
        %v320 = vld [vmem:[#allocation9 + $0x58] sm:$0xff]
        %v321 = vld [vmem:[#allocation9 + $0x60] sm:$0xff]
        %v322 = vld [vmem:[#allocation9 + $0x68] sm:$0xff]
        %v323 = vld [vmem:[#allocation9 + $0x70] sm:$0xff]
        %v324 = vld [vmem:[#allocation9 + $0x78] sm:$0xff]
        %325 = vmatpush.xpose.msra.mxu0 %v324
        %326 = vmatpush.xpose.msra.mxu0 %v323
        %327 = vmatpush.xpose.msra.mxu0 %v322
        %328 = vmatpush.xpose.msra.mxu0 %v321
        %329 = vmatpush.xpose.msra.mxu0 %v320
        %330 = vmatpush.xpose.msra.mxu0 %v319
        %331 = vmatpush.xpose.msra.mxu0 %v318
        %332 = vmatpush.xpose.msra.mxu0 %v317
        %333 = vmatpush.xpose.msra.mxu0 %v316
        %334 = vmatpush.xpose.msra.mxu0 %v315
        %335 = vmatpush.xpose.msra.mxu0 %v314
        %336 = vmatpush.xpose.msra.mxu0 %v313
        %337 = vmatpush.xpose.msra.mxu0 %v312
        %338 = vmatpush.xpose.msra.mxu0 %v311
        %339 = vmatpush.xpose.msra.mxu0 %v310
        %340 = vmatpush.xpose.msra.mxu0 %v309
        %341 = vmatmul.f32.gmra.mxu0 %v308
        %v342 = vpop.f32.mrf.mxu0
        %v343 = vadd.f32 0.0, %v342
        %344 = vdwg.mxu0
        %v345 = vld [vmem:[#allocation11] sm:$0xff]
        %v346 = vld [vmem:[#allocation11 + $0x8] sm:$0xff]
        %v347 = vld [vmem:[#allocation11 + $0x10] sm:$0xff]
        %v348 = vld [vmem:[#allocation11 + $0x18] sm:$0xff]
        %v349 = vld [vmem:[#allocation11 + $0x20] sm:$0xff]
        %v350 = vld [vmem:[#allocation11 + $0x28] sm:$0xff]
        %v351 = vld [vmem:[#allocation11 + $0x30] sm:$0xff]
        %v352 = vld [vmem:[#allocation11 + $0x38] sm:$0xff]
        %v353 = vld [vmem:[#allocation11 + $0x40] sm:$0xff]
        %v354 = vld [vmem:[#allocation11 + $0x48] sm:$0xff]
        %v355 = vld [vmem:[#allocation11 + $0x50] sm:$0xff]
        %v356 = vld [vmem:[#allocation11 + $0x58] sm:$0xff]
        %v357 = vld [vmem:[#allocation11 + $0x60] sm:$0xff]
        %v358 = vld [vmem:[#allocation11 + $0x68] sm:$0xff]
        %v359 = vld [vmem:[#allocation11 + $0x70] sm:$0xff]
        %v360 = vld [vmem:[#allocation11 + $0x78] sm:$0xff]
        %v361 = vld [vmem:[#allocation11 + $0x80] sm:$0xff]
        %v362 = vld [vmem:[#allocation11 + $0x88] sm:$0xff]
        %v363 = vld [vmem:[#allocation11 + $0x90] sm:$0xff]
        %v364 = vld [vmem:[#allocation11 + $0x98] sm:$0xff]
        %v365 = vld [vmem:[#allocation11 + $0xa0] sm:$0xff]
        %v366 = vld [vmem:[#allocation11 + $0xa8] sm:$0xff]
        %v367 = vld [vmem:[#allocation11 + $0xb0] sm:$0xff]
        %v368 = vld [vmem:[#allocation11 + $0xb8] sm:$0xff]
        %v369 = vld [vmem:[#allocation11 + $0xc0] sm:$0xff]
        %v370 = vld [vmem:[#allocation11 + $0xc8] sm:$0xff]
        %v371 = vld [vmem:[#allocation11 + $0xd0] sm:$0xff]
        %v372 = vld [vmem:[#allocation11 + $0xd8] sm:$0xff]
        %v373 = vld [vmem:[#allocation11 + $0xe0] sm:$0xff]
        %v374 = vld [vmem:[#allocation11 + $0xe8] sm:$0xff]
        %v375 = vld [vmem:[#allocation11 + $0xf0] sm:$0xff]
        %v376 = vld [vmem:[#allocation11 + $0xf8] sm:$0xff]
        %v377 = vld [vmem:[#allocation12] sm:$0x3]
        %v379 = vperm.slane %v377, 0
        %v380 = vperm.slane %v377, 1
        %383 = vmatpush.xpose.msra.mxu0 %v360
        %384 = vmatpush.xpose.msra.mxu0 %v359
        %385 = vmatpush.xpose.msra.mxu0 %v358
        %386 = vmatpush.xpose.msra.mxu0 %v357
        %387 = vmatpush.xpose.msra.mxu0 %v356
        %388 = vmatpush.xpose.msra.mxu0 %v355
        %389 = vmatpush.xpose.msra.mxu0 %v354
        %390 = vmatpush.xpose.msra.mxu0 %v353
        %391 = vmatpush.xpose.msra.mxu0 %v352
        %392 = vmatpush.xpose.msra.mxu0 %v351
        %393 = vmatpush.xpose.msra.mxu0 %v350
        %394 = vmatpush.xpose.msra.mxu0 %v349
        %395 = vmatpush.xpose.msra.mxu0 %v348
        %396 = vmatpush.xpose.msra.mxu0 %v347
        %397 = vmatpush.xpose.msra.mxu0 %v346
        %398 = vmatpush.xpose.msra.mxu0 %v345
        %399 = vmatmul.f32.gmra.mxu0 %v343
        %v400 = vpop.f32.mrf.mxu0
        %v401 = vadd.f32 %v379, %v400
        %402 = vdwg.mxu0
        %403 = vmatpush.xpose.msra.mxu0 %v376
        %404 = vmatpush.xpose.msra.mxu0 %v375
        %405 = vmatpush.xpose.msra.mxu0 %v374
        %406 = vmatpush.xpose.msra.mxu0 %v373
        %407 = vmatpush.xpose.msra.mxu0 %v372
        %408 = vmatpush.xpose.msra.mxu0 %v371
        %409 = vmatpush.xpose.msra.mxu0 %v370
        %410 = vmatpush.xpose.msra.mxu0 %v369
        %411 = vmatpush.xpose.msra.mxu0 %v368
        %412 = vmatpush.xpose.msra.mxu0 %v367
        %413 = vmatpush.xpose.msra.mxu0 %v366
        %414 = vmatpush.xpose.msra.mxu0 %v365
        %415 = vmatpush.xpose.msra.mxu0 %v364
        %416 = vmatpush.xpose.msra.mxu0 %v363
        %417 = vmatpush.xpose.msra.mxu0 %v362
        %418 = vmatpush.xpose.msra.mxu0 %v361
        %419 = vmatmul.f32.gmra.mxu0 %v343
        %v420 = vpop.f32.mrf.mxu0
        %v421 = vadd.f32 %v380, %v420
        %422 = vdwg.mxu0
        %v423 = vmax.f32 %v401, 0.0
        %v424 = vsub.f32 0.0, %v421
        %v425 = vmul.f32 %v424, 1.442695
        %v426 = vpow.pop %v425
        %v427 = vadd.f32 %v426, 1.0
        %v428 = vrcp.pop %v427
        %v429 = vsub.f32 %v423, %v343
        %v430 = vmul.f32 %v428, %v429
        %v431 = vadd.f32 %v343, %v430
        %s432 = scalar_lea.vmem [#allocation11], 256
        %v433 = vld [vmem:[%s432] sm:$0xff]
        %v434 = vld [vmem:[%s432 + $0x8] sm:$0xff]
        %v435 = vld [vmem:[%s432 + $0x10] sm:$0xff]
        %v436 = vld [vmem:[%s432 + $0x18] sm:$0xff]
        %v437 = vld [vmem:[%s432 + $0x20] sm:$0xff]
        %v438 = vld [vmem:[%s432 + $0x28] sm:$0xff]
        %v439 = vld [vmem:[%s432 + $0x30] sm:$0xff]
        %v440 = vld [vmem:[%s432 + $0x38] sm:$0xff]
        %v441 = vld [vmem:[%s432 + $0x40] sm:$0xff]
        %v442 = vld [vmem:[%s432 + $0x48] sm:$0xff]
        %v443 = vld [vmem:[%s432 + $0x50] sm:$0xff]
        %v444 = vld [vmem:[%s432 + $0x58] sm:$0xff]
        %v445 = vld [vmem:[%s432 + $0x60] sm:$0xff]
        %v446 = vld [vmem:[%s432 + $0x68] sm:$0xff]
        %v447 = vld [vmem:[%s432 + $0x70] sm:$0xff]
        %v448 = vld [vmem:[%s432 + $0x78] sm:$0xff]
        %v449 = vld [vmem:[%s432 + $0x80] sm:$0xff]
        %v450 = vld [vmem:[%s432 + $0x88] sm:$0xff]
        %v451 = vld [vmem:[%s432 + $0x90] sm:$0xff]
        %v452 = vld [vmem:[%s432 + $0x98] sm:$0xff]
        %v453 = vld [vmem:[%s432 + $0xa0] sm:$0xff]
        %v454 = vld [vmem:[%s432 + $0xa8] sm:$0xff]
        %v455 = vld [vmem:[%s432 + $0xb0] sm:$0xff]
        %v456 = vld [vmem:[%s432 + $0xb8] sm:$0xff]
        %v457 = vld [vmem:[%s432 + $0xc0] sm:$0xff]
        %v458 = vld [vmem:[%s432 + $0xc8] sm:$0xff]
        %v459 = vld [vmem:[%s432 + $0xd0] sm:$0xff]
        %v460 = vld [vmem:[%s432 + $0xd8] sm:$0xff]
        %v461 = vld [vmem:[%s432 + $0xe0] sm:$0xff]
        %v462 = vld [vmem:[%s432 + $0xe8] sm:$0xff]
        %v463 = vld [vmem:[%s432 + $0xf0] sm:$0xff]
        %v464 = vld [vmem:[%s432 + $0xf8] sm:$0xff]
        %s465 = scalar_lea.vmem [#allocation12], 2
        %v466 = vld [vmem:[%s465] sm:$0x3]
        %v468 = vperm.slane %v466, 0
        %v469 = vperm.slane %v466, 1
        %472 = vmatpush.xpose.msra.mxu0 %v448
        %473 = vmatpush.xpose.msra.mxu0 %v447
        %474 = vmatpush.xpose.msra.mxu0 %v446
        %475 = vmatpush.xpose.msra.mxu0 %v445
        %476 = vmatpush.xpose.msra.mxu0 %v444
        %477 = vmatpush.xpose.msra.mxu0 %v443
        %478 = vmatpush.xpose.msra.mxu0 %v442
        %479 = vmatpush.xpose.msra.mxu0 %v441
        %480 = vmatpush.xpose.msra.mxu0 %v440
        %481 = vmatpush.xpose.msra.mxu0 %v439
        %482 = vmatpush.xpose.msra.mxu0 %v438
        %483 = vmatpush.xpose.msra.mxu0 %v437
        %484 = vmatpush.xpose.msra.mxu0 %v436
        %485 = vmatpush.xpose.msra.mxu0 %v435
        %486 = vmatpush.xpose.msra.mxu0 %v434
        %487 = vmatpush.xpose.msra.mxu0 %v433
        %488 = vmatmul.f32.gmra.mxu0 %v431
        %v489 = vpop.f32.mrf.mxu0
        %v490 = vadd.f32 %v468, %v489
        %491 = vdwg.mxu0
        %492 = vmatpush.xpose.msra.mxu0 %v464
        %493 = vmatpush.xpose.msra.mxu0 %v463
        %494 = vmatpush.xpose.msra.mxu0 %v462
        %495 = vmatpush.xpose.msra.mxu0 %v461
        %496 = vmatpush.xpose.msra.mxu0 %v460
        %497 = vmatpush.xpose.msra.mxu0 %v459
        %498 = vmatpush.xpose.msra.mxu0 %v458
        %499 = vmatpush.xpose.msra.mxu0 %v457
        %500 = vmatpush.xpose.msra.mxu0 %v456
        %501 = vmatpush.xpose.msra.mxu0 %v455
        %502 = vmatpush.xpose.msra.mxu0 %v454
        %503 = vmatpush.xpose.msra.mxu0 %v453
        %504 = vmatpush.xpose.msra.mxu0 %v452
        %505 = vmatpush.xpose.msra.mxu0 %v451
        %506 = vmatpush.xpose.msra.mxu0 %v450
        %507 = vmatpush.xpose.msra.mxu0 %v449
        %508 = vmatmul.f32.gmra.mxu0 %v431
        %v509 = vpop.f32.mrf.mxu0
        %v510 = vadd.f32 %v469, %v509
        %511 = vdwg.mxu0
        %v512 = vmax.f32 %v490, 0.0
        %v513 = vsub.f32 0.0, %v510
        %v514 = vmul.f32 %v513, 1.442695
        %v515 = vpow.pop %v514
        %v516 = vadd.f32 %v515, 1.0
        %v517 = vrcp.pop %v516
        %v518 = vsub.f32 %v512, %v431
        %v519 = vmul.f32 %v517, %v518
        %v520 = vadd.f32 %v431, %v519
        %521 = vst [vmem:[%s265] sm:$0xff] %v520
        %s522 = sand.u32 %s136, 1
        %s523 = scalar_lea.sflag [#allocation8], %s522
        %s524 = sand.u32 %s136, 1
        %s525 = smul.addr %s524, 8
        %s526 = scalar_lea.vmem [#allocation14], %s525
        // Predicated region
        $region53: #{tpu_custom_call.1} parent=35 // pred_check
          %p527 = pneg %p146
        $region54: #{tpu_custom_call.1} parent=35 // pred_check_branch
          %529 = sbr.rel (%p527) target = $region56
        $region55: #{tpu_custom_call.1} parent=35 // pred_region
          %s530 = sadd.s32 %s34, %s35
          %532 = vsyncadd %s523, 0
          %s533 = smul.addr %s530, 8
          %s534 = scalar_lea.hbm %s5, %s533
          %s536 = sshll.u32 %s526, 4
          %s537 = int_to_ptr.vmem [resolvable:$true] %s536
          %s538 = sshll.u32 %s534, 4
          %s539 = int_to_ptr.hbm [resolvable:$true] %s538
          %541 = dma.vmem_to_hbm [thread:$0]  %s537, 128, %s539, %s523
        $region56: #{tpu_custom_call.1} parent=35 // pred_fallthru
          _
      $region36: #{tpu_custom_call.1} parent=5 // pred_fallthru
        _
      %p542 = scmp.le.s32.totalorder 2, %s25
      // Predicated region
      $region57: #{tpu_custom_call.1} parent=5 // pred_check
        %p543 = pneg %p542
      $region58: #{tpu_custom_call.1} parent=5 // pred_check_branch
        %545 = sbr.rel (%p543) target = $region60
      $region59: #{tpu_custom_call.1} parent=5 // pred_region
        %s546 = ssub.s32 %s25, 2
        // Predicated region
        $region61: #{tpu_custom_call.1} parent=59 // pred_check
          %p547 = pneg %p152
        $region62: #{tpu_custom_call.1} parent=59 // pred_check_branch
          %549 = sbr.rel (%p547) target = $region64
        $region63: #{tpu_custom_call.1} parent=59 // pred_region
          %s550 = sand.u32 %s137, 1
          %s551 = scalar_lea.sflag [#allocation8], %s550
          %s552 = sand.u32 %s137, 1
          %s553 = smul.addr %s552, 8
          %s554 = scalar_lea.vmem [#allocation14], %s553
          %556 = dma.done %s551, 128
        $region64: #{tpu_custom_call.1} parent=59 // pred_fallthru
          _
      $region60: #{tpu_custom_call.1} parent=5 // pred_fallthru
        _
    $region6: #{tpu_custom_call.1} parent=1 // loop_footer
      %s29 = sadd.s32 1, %s25
    $region7: #{tpu_custom_call.1} parent=1 // loop_footer_branch
      %24 = sbr.rel target = $region3
    $region8: #{tpu_custom_call.1} parent=1 // loop_exit
      _
    %557 = vsyncpa [#allocation7], 1
    %s558 = scalar_lea.sflag [#allocation7], 1
    %559 = vsyncpa %s558, 1
    %560 = vsyncpa [#allocation10], 1
    %561 = vsyncpa [#allocation13], 1
    %562 = vsyncpa [#allocation8], 1
    %s563 = scalar_lea.sflag [#allocation8], 1
    %564 = vsyncpa %s563, 1
  %565 = vsyncmov [#allocation3]
  %s566 = vpop.sfrf %565
  %p567 = scmp.eq.s32.totalorder %s566, 0
  %p568 = pneg %p567
  %570 = shalt.err (%p568)
  %s571 = scalar_lea.sflag [#allocation3], 1
  %572 = vsyncmov %s571
  %s573 = vpop.sfrf %572
  %p574 = scmp.eq.s32.totalorder %s573, 0
  %p575 = pneg %p574
  %577 = shalt.err (%p575)

</llo_original>
